<compile_context>
chip_gen: v5e
topology: v5e:2x2
jax: 0.10.0
libtpu: 0.0.40
codegen_flags: <defaults>
</compile_context>

<pallas_src>
import jax
import jax.numpy as jnp
from jax.experimental import pallas as pl
from jax.experimental.pallas import tpu as pltpu


def _proximity_kernel(labels_ref, x_ref, c_ref, o_ref):
    # labels: (B, 1) i32 VMEM, x: (B, D) f32 VMEM, c: (C, D) f32 VMEM,
    # o: (1, 1) f32 SMEM (fully reduced scalar).
    x = x_ref[...].astype(jnp.float32)          # (B, D)
    c = c_ref[...].astype(jnp.float32)          # (C, D)
    labels = labels_ref[...]                    # (B, 1) int32

    B, _ = x.shape
    C = c.shape[0]

    # Gather each row's own-class center with an unrolled VPU select over the
    # (small, static) class count.  Pure VALU work, no MXU / XLU on the critical
    # path.  NOTE: if C ever grows large, switch to a scalar-prefetch
    # (PrefetchScalarGridSpec) label-driven gather instead of streaming all C*D
    # center bytes.
    c_lab = jnp.zeros_like(x)                   # (B, D) f32
    for k in range(C):                          # C = 4: unrolled at trace time
        sel = labels == k                       # (B, 1) bool
        c_lab = c_lab + jnp.where(sel, c[k:k + 1, :], 0.0)   # (B, D)

    # Squared distance to the own-class center.  Mathematically identical to the
    # PyTorch distmat gather, but non-negative by construction (no catastrophic
    # cancellation -> no NaN after sqrt).
    diff = x - c_lab
    picked = jnp.sum(diff * diff, axis=1, keepdims=True)     # (B, 1)

    # Match the PyTorch module's order exactly: sqrt, then clamp(1e-12, 1e12),
    # then mean.  Full reduce to a scalar, stored to SMEM.
    val = jnp.clip(jnp.sqrt(picked), 1e-12, 1e12)             # (B, 1)
    o_ref[0, 0] = jnp.mean(val)


def proximity_loss(x, centers, labels):
    """x: (B, z_dim) f32, centers: (num_classes, z_dim) f32, labels: (B,) int -> scalar."""
    B, D = x.shape
    C, _ = centers.shape
    labels_2d = labels.astype(jnp.int32).reshape(B, 1)

    # Advisory cost hint: O(B*C*D) selects + O(B*D) epilogue, ~1.6 KB of traffic.
    cost = pl.CostEstimate(
        flops=2 * B * C * D + 4 * B * D,
        transcendentals=B,
        bytes_accessed=(B * D + C * D + B) * 4 + 4,
    )

    out = pl.pallas_call(
        _proximity_kernel,
        out_shape=jax.ShapeDtypeStruct((1, 1), jnp.float32),
        in_specs=[
            pl.BlockSpec((B, 1), lambda: (0, 0)),   # labels (tiny i32 tile)
            pl.BlockSpec((B, D), lambda: (0, 0)),   # x
            pl.BlockSpec((C, D), lambda: (0, 0)),   # centers
        ],
        # Fully reduced scalar -> canonical SMEM output (no padded VMEM tile
        # writeback for 4 useful bytes).
        out_specs=pl.BlockSpec(memory_space=pltpu.MemorySpace.SMEM),
        cost_estimate=cost,
    )(labels_2d, x, centers)
    return out[0, 0]


if __name__ == "__main__":
    # Module config: num_classes=4, z_dim=32, batch=8
    num_classes = 4
    z_dim = 32
    batch = 8

    key = jax.random.PRNGKey(0)
    k_x, k_c, k_l = jax.random.split(key, 3)

    x = jax.random.normal(k_x, (batch, z_dim), dtype=jnp.float32)
    centers = jax.random.normal(k_c, (num_classes, z_dim), dtype=jnp.float32)  # ~ randn init
    labels = jax.random.randint(k_l, (batch,), 0, num_classes, dtype=jnp.int32)

    loss_fn = jax.jit(proximity_loss)   # keep the pallas_call inside a surrounding jit
    loss = loss_fn(x, centers, labels)
    jax.block_until_ready(loss)

    # Pure-JAX reference mirroring the PyTorch forward:
    # distmat -> gather own-class entry -> sqrt -> clamp -> mean
    distmat = (
        jnp.sum(x**2, axis=1, keepdims=True)
        + jnp.sum(centers**2, axis=1)[None, :]
        - 2.0 * x @ centers.T
    )
    picked = distmat[jnp.arange(batch), labels]
    ref = jnp.mean(jnp.clip(jnp.sqrt(picked), 1e-12, 1e12))
    assert jnp.allclose(loss, ref, rtol=1e-5, atol=1e-5), (loss, ref)

    print("KERNEL_OK")
</pallas_src>

<mosaic_0001>
module attributes {stable_mosaic.version = 11 : i64} {
  func.func @_proximity_kernel(%arg0: memref<8x1xi32, #tpu.memory_space<vmem>>, %arg1: memref<8x32xf32, #tpu.memory_space<vmem>>, %arg2: memref<4x32xf32, #tpu.memory_space<vmem>>, %arg3: memref<1x1xf32, #tpu.memory_space<smem>>) attributes {dimension_semantics = [], scalar_prefetch = 0 : i64, scratch_operands = 0 : i64, tpu.core_type = #tpu.core_type<tc>} {
    %c0 = arith.constant 0 : index
    %c0_0 = arith.constant 0 : index
    %0 = vector.load %arg1[%c0, %c0_0] : memref<8x32xf32, #tpu.memory_space<vmem>>, vector<8x32xf32>
    %c0_1 = arith.constant 0 : index
    %c0_2 = arith.constant 0 : index
    %1 = vector.load %arg2[%c0_1, %c0_2] : memref<4x32xf32, #tpu.memory_space<vmem>>, vector<4x32xf32>
    %c0_3 = arith.constant 0 : index
    %c0_4 = arith.constant 0 : index
    %2 = vector.load %arg0[%c0_3, %c0_4] : memref<8x1xi32, #tpu.memory_space<vmem>>, vector<8x1xi32>
    %cst = arith.constant 0.000000e+00 : f32
    %3 = vector.broadcast %cst : f32 to vector<8x32xf32>
    %c0_i32 = arith.constant 0 : i32
    %4 = vector.broadcast %c0_i32 : i32 to vector<8x1xi32>
    %5 = arith.cmpi eq, %2, %4 : vector<8x1xi32>
    %6 = vector.extract_strided_slice %1 {offsets = [0, 0], sizes = [1, 32], strides = [1, 1]} : vector<4x32xf32> to vector<1x32xf32>
    %cst_5 = arith.constant 0.000000e+00 : f32
    %7 = vector.shape_cast %5 : vector<8x1xi1> to vector<8x1xi1>
    %8 = vector.broadcast %7 : vector<8x1xi1> to vector<8x32xi1>
    %9 = vector.shape_cast %6 : vector<1x32xf32> to vector<1x32xf32>
    %10 = vector.broadcast %9 : vector<1x32xf32> to vector<8x32xf32>
    %11 = vector.broadcast %cst_5 : f32 to vector<8x32xf32>
    %12 = arith.select %8, %10, %11 : vector<8x32xi1>, vector<8x32xf32>
    %13 = arith.addf %3, %12 : vector<8x32xf32>
    %c1_i32 = arith.constant 1 : i32
    %14 = vector.broadcast %c1_i32 : i32 to vector<8x1xi32>
    %15 = arith.cmpi eq, %2, %14 : vector<8x1xi32>
    %16 = vector.extract_strided_slice %1 {offsets = [1, 0], sizes = [1, 32], strides = [1, 1]} : vector<4x32xf32> to vector<1x32xf32>
    %cst_6 = arith.constant 0.000000e+00 : f32
    %17 = vector.shape_cast %15 : vector<8x1xi1> to vector<8x1xi1>
    %18 = vector.broadcast %17 : vector<8x1xi1> to vector<8x32xi1>
    %19 = vector.shape_cast %16 : vector<1x32xf32> to vector<1x32xf32>
    %20 = vector.broadcast %19 : vector<1x32xf32> to vector<8x32xf32>
    %21 = vector.broadcast %cst_6 : f32 to vector<8x32xf32>
    %22 = arith.select %18, %20, %21 : vector<8x32xi1>, vector<8x32xf32>
    %23 = arith.addf %13, %22 : vector<8x32xf32>
    %c2_i32 = arith.constant 2 : i32
    %24 = vector.broadcast %c2_i32 : i32 to vector<8x1xi32>
    %25 = arith.cmpi eq, %2, %24 : vector<8x1xi32>
    %26 = vector.extract_strided_slice %1 {offsets = [2, 0], sizes = [1, 32], strides = [1, 1]} : vector<4x32xf32> to vector<1x32xf32>
    %cst_7 = arith.constant 0.000000e+00 : f32
    %27 = vector.shape_cast %25 : vector<8x1xi1> to vector<8x1xi1>
    %28 = vector.broadcast %27 : vector<8x1xi1> to vector<8x32xi1>
    %29 = vector.shape_cast %26 : vector<1x32xf32> to vector<1x32xf32>
    %30 = vector.broadcast %29 : vector<1x32xf32> to vector<8x32xf32>
    %31 = vector.broadcast %cst_7 : f32 to vector<8x32xf32>
    %32 = arith.select %28, %30, %31 : vector<8x32xi1>, vector<8x32xf32>
    %33 = arith.addf %23, %32 : vector<8x32xf32>
    %c3_i32 = arith.constant 3 : i32
    %34 = vector.broadcast %c3_i32 : i32 to vector<8x1xi32>
    %35 = arith.cmpi eq, %2, %34 : vector<8x1xi32>
    %36 = vector.extract_strided_slice %1 {offsets = [3, 0], sizes = [1, 32], strides = [1, 1]} : vector<4x32xf32> to vector<1x32xf32>
    %cst_8 = arith.constant 0.000000e+00 : f32
    %37 = vector.shape_cast %35 : vector<8x1xi1> to vector<8x1xi1>
    %38 = vector.broadcast %37 : vector<8x1xi1> to vector<8x32xi1>
    %39 = vector.shape_cast %36 : vector<1x32xf32> to vector<1x32xf32>
    %40 = vector.broadcast %39 : vector<1x32xf32> to vector<8x32xf32>
    %41 = vector.broadcast %cst_8 : f32 to vector<8x32xf32>
    %42 = arith.select %38, %40, %41 : vector<8x32xi1>, vector<8x32xf32>
    %43 = arith.addf %33, %42 : vector<8x32xf32>
    %44 = arith.subf %0, %43 : vector<8x32xf32>
    %45 = arith.mulf %44, %44 : vector<8x32xf32>
    %cst_9 = arith.constant dense<0.000000e+00> : vector<8xf32>
    %46 = vector.multi_reduction <add>, %45, %cst_9 [1] : vector<8x32xf32> to vector<8xf32>
    %47 = vector.shape_cast %46 : vector<8xf32> to vector<8x1xf32>
    %48 = math.sqrt %47 : vector<8x1xf32>
    %cst_10 = arith.constant 9.99999996E-13 : f32
    %cst_11 = arith.constant 9.99999995E+11 : f32
    %49 = vector.broadcast %cst_10 : f32 to vector<8x1xf32>
    %50 = arith.maximumf %49, %48 : vector<8x1xf32>
    %51 = vector.broadcast %cst_11 : f32 to vector<8x1xf32>
    %52 = arith.minimumf %51, %50 : vector<8x1xf32>
    %53 = vector.shape_cast %52 : vector<8x1xf32> to vector<1x8x1xf32>
    %cst_12 = arith.constant dense<0.000000e+00> : vector<1xf32>
    %54 = vector.multi_reduction <add>, %53, %cst_12 [1, 2] : vector<1x8x1xf32> to vector<1xf32>
    %55 = vector.shape_cast %54 : vector<1xf32> to vector<1x1x1xf32>
    %56 = vector.extract %55[0, 0, 0] : f32 from vector<1x1x1xf32>
    %cst_13 = arith.constant 8.000000e+00 : f32
    %57 = arith.divf %56, %cst_13 : f32
    %c0_14 = arith.constant 0 : index
    %c0_15 = arith.constant 0 : index
    %58 = memref.load %arg3[%c0_14, %c0_15] : memref<1x1xf32, #tpu.memory_space<smem>>
    memref.store %57, %arg3[%c0_14, %c0_15] : memref<1x1xf32, #tpu.memory_space<smem>>
    return
  }
}

</mosaic_0001>

<llo_original>
// kernel: proximity_loss.1
$region0: #{proximity_loss.1}
  #allocation0 [shape = 'u32[]', space=smem, size = 0x4, offset = 0x4, fixed_abs, tag = 'smem constant byte address 0x4 - core index']
  #allocation1 [shape = 'u32[72,128]{1,0:T(1,128)}', space=vmem, size = 0x9000, scoped, tag = 'internal scratch']
  %s0 = inlined_call_operand.vmem [shape: s32[8,1], index: 0, kind: input, shape index: {}]
  %s1 = inlined_call_operand.vmem [shape: f32[8,32], index: 1, kind: input, shape index: {}]
  %s2 = inlined_call_operand.hbm [shape: f32[4,32], index: 2, kind: input, shape index: {}]
  %s3 = inlined_call_operand.hbm [shape: f32[1,1], index: 3, kind: output, shape index: {}]
  %s4 = sld [smem:[#allocation0]]
  $region26: #{proximity_loss.1} parent=0
    _
  %s6 = ssub.s32 1, %s4
  %s7 = scalar_select 0, %s6, %s4
  $region1: #{proximity_loss.1} parent=0
    #allocation2 [shape = 'u8[2048]{0}', space=vmem, size = 0x800, scoped, tag = 'input window, operand 2, single buffered']
    #allocation3 [shape = 's32[1]{0}', space=sflag, size = 0x4, scoped, tag = 'scoped memory for proximity_loss.1']
    #allocation4 [shape = 's32[1]{0}', space=sflag, size = 0x4, scoped, tag = 'scoped memory for proximity_loss.1']
    #allocation5 [shape = 'u8[512]{0}', space=smem, size = 0x200, scoped, tag = 'output window, operand 0, single buffered']
    %8 = vsyncpa [#allocation3], 0
    %9 = vsyncpa [#allocation4], 0
    // Predicated region
    $region2: #{proximity_loss.1} parent=1 // pred_check
      _
    $region3: #{proximity_loss.1} parent=1 // pred_check_branch
      %11 = sbr.rel (0) target = $region5
    $region4: #{proximity_loss.1} parent=1 // pred_region
      _
    $region5: #{proximity_loss.1} parent=1 // pred_fallthru
      _
    // Predicated region
    $region6: #{proximity_loss.1} parent=1 // pred_check
      _
    $region7: #{proximity_loss.1} parent=1 // pred_check_branch
      %13 = sbr.rel (0) target = $region9
    $region8: #{proximity_loss.1} parent=1 // pred_region
      _
    $region9: #{proximity_loss.1} parent=1 // pred_fallthru
      _
    // Predicated region
    $region10: #{proximity_loss.1} parent=1 // pred_check
      _
    $region11: #{proximity_loss.1} parent=1 // pred_check_branch
      %15 = sbr.rel (0) target = $region13
    $region12: #{proximity_loss.1} parent=1 // pred_region
      %17 = vsyncadd [#allocation3], 0
      %s19 = sshll.u32 %s2, 4
      %s20 = int_to_ptr.hbm [resolvable:$true] %s19
      %s21 = sshll.u32 [#allocation2], 4
      %s22 = int_to_ptr.vmem [resolvable:$true] %s21
      %24 = dma.hbm_to_vmem [thread:$0]  %s20, 64, %s22, [#allocation3]
    $region13: #{proximity_loss.1} parent=1 // pred_fallthru
      _
    // Predicated region
    $region14: #{proximity_loss.1} parent=1 // pred_check
      _
    $region15: #{proximity_loss.1} parent=1 // pred_check_branch
      %26 = sbr.rel (0) target = $region17
    $region16: #{proximity_loss.1} parent=1 // pred_region
      %28 = dma.done [#allocation3], 64
    $region17: #{proximity_loss.1} parent=1 // pred_fallthru
      _
    %v29 = vld [vmem:[%s1] sm:$0xff]
    %v30 = vld [vmem:[#allocation2] sm:$0xf]
    %v31 = vld [vmem:[%s0] sm:$0xff]
    %vm32 = vcmp.eq.s32.totalorder %v31, 0
    %v33 = vsel %vm32, 1, 0
    %34 = vset.pattern.permute.xlu0 0
    %35 = vperm.xlu0 %34, %v33
    %v36 = vpop.permute.xlu0 %35
    %vm37 = vcmp.eq.s32.totalorder %v36, 1
    %v38 = vperm.slane %v30, 0
    %v39 = vsel %vm37, %v38, 0.0
    %v40 = vadd.f32 %v39, 0.0
    %vm41 = vcmp.eq.s32.totalorder %v31, 1
    %v42 = vsel %vm41, 1, 0
    %43 = vset.pattern.permute.xlu0 0
    %44 = vperm.xlu0 %43, %v42
    %v45 = vpop.permute.xlu0 %44
    %vm46 = vcmp.eq.s32.totalorder %v45, 1
    %v47 = vperm.slane %v30, 1
    %v48 = vsel %vm46, %v47, 0.0
    %v49 = vadd.f32 %v40, %v48
    %vm50 = vcmp.eq.s32.totalorder %v31, 2
    %v51 = vsel %vm50, 1, 0
    %52 = vset.pattern.permute.xlu0 0
    %53 = vperm.xlu0 %52, %v51
    %v54 = vpop.permute.xlu0 %53
    %vm55 = vcmp.eq.s32.totalorder %v54, 1
    %v56 = vperm.slane %v30, 2
    %v57 = vsel %vm55, %v56, 0.0
    %v58 = vadd.f32 %v49, %v57
    %vm59 = vcmp.eq.s32.totalorder %v31, 3
    %v60 = vsel %vm59, 1, 0
    %61 = vset.pattern.permute.xlu0 0
    %62 = vperm.xlu0 %61, %v60
    %v63 = vpop.permute.xlu0 %62
    %vm64 = vcmp.eq.s32.totalorder %v63, 1
    %v65 = vperm.slane %v30, 3
    %v66 = vsel %vm64, %v65, 0.0
    %v67 = vadd.f32 %v58, %v66
    %v68 = vsub.f32 %v29, %v67
    %v69 = vmul.f32 %v68, %v68
    %vm70 = vcmask 261120
    %v71 = vsel %vm70, %v69, 0.0
    %72 = vadd.xlane.f32.xlu0 %v71
    %v73 = vpop.xlane.xlu0 %72
    %v74 = vrsqrt.pop %v73
    %v75 = vmul.f32 %v74, %v73
    %v76 = vmul.f32 %v75, %v74
    %v77 = vmul.f32 0.5, %v76
    %v78 = vsub.f32 1.5, %v77
    %v79 = vmul.f32 %v74, %v78
    %v80 = vmul.f32 %v73, %v79
    %vm81 = vcmp.eq.f32.partialorder %v73, inf
    %v82 = vsel %vm81, %v73, %v80
    %vm83 = vcmp.eq.f32.partialorder %v73, 0.0
    %v84 = vand.u32 %v73, 2147483648
    %v85 = vsel %vm83, %v84, %v82
    %v86 = vmax.f32 %v85, 1e-12
    %v87 = vmin.f32 %v86, 1e+12
    %vm88 = vcmask 7168
    %v89 = vsel %vm88, %v87, 0.0
    %90 = vadd.xlane.f32.xlu0 %v89
    %v91 = vpop.xlane.xlu0 %90
    %v92 = vrot.slane %v91, 4
    %v93 = vadd.f32 %v91, %v92
    %v94 = vrot.slane %v93, 2
    %v95 = vadd.f32 %v93, %v94
    %v96 = vrot.slane %v95, 1
    %v97 = vadd.f32 %v95, %v96
    %s98 = vtos %v97
    %v99 = vrcp.pop 8.0
    %v100 = vmul.f32 8.0, %v99
    %v101 = vsub.f32 1.0, %v100
    %v102 = vmul.f32 %v99, %v101
    %v103 = vadd.f32 %v99, %v102
    %vm104 = vweird.f32 %v99
    %v105 = vsel %vm104, %v99, %v103
    %s106 = vtos %v105
    %s107 = smul.f32 %s98, %s106
    %s108 = scalar_lea.smem [#allocation5], 0
    %109 = sst [smem:[%s108]] %s107
    // Predicated region
    $region18: #{proximity_loss.1} parent=1 // pred_check
      _
    $region19: #{proximity_loss.1} parent=1 // pred_check_branch
      %111 = sbr.rel (0) target = $region21
    $region20: #{proximity_loss.1} parent=1 // pred_region
      %113 = vsyncadd [#allocation4], 0
      %s115 = sshll.u32 %s3, 4
      %s116 = int_to_ptr.hbm [resolvable:$true] %s115
      %118 = dma.smem_to_hbm [#allocation5], 16, %s116, [#allocation4]
    $region21: #{proximity_loss.1} parent=1 // pred_fallthru
      _
    // Predicated region
    $region22: #{proximity_loss.1} parent=1 // pred_check
      _
    $region23: #{proximity_loss.1} parent=1 // pred_check_branch
      %120 = sbr.rel (0) target = $region25
    $region24: #{proximity_loss.1} parent=1 // pred_region
      %122 = dma.done [#allocation4], 16
    $region25: #{proximity_loss.1} parent=1 // pred_fallthru
      _
    %123 = sfence
    %124 = vsyncpa [#allocation3], 1
    %125 = vsyncpa [#allocation4], 1

</llo_original>
